<compile_context>
chip_gen: v6e
topology: v6e:2x2x1
jax: 0.10.0
libtpu: 0.0.40
codegen_flags: <defaults>
</compile_context>

<pallas_src>
import jax
import jax.numpy as jnp
from jax.experimental import pallas as pl
from jax.experimental.pallas import tpu as pltpu

# Closes the relu gate on padded lanes -> exact 0 output there.
_BIAS_PAD = -1e30


def _round_up(x, m):
    return ((x + m - 1) // m) * m


def _modrelu_kernel(xr_ref, xi_ref, b_ref, or_ref, oi_ref):
    xr = xr_ref[...]                                 # (tb, tn) f32
    xi = xi_ref[...]                                 # (tb, tn) f32
    b = b_ref[...]                                   # (1, tn)  f32, row-broadcast
    mag2 = xr * xr + xi * xi                         # |z|^2
    # TODO(synk): mzi_onn_sim.bp.forwardmodReLU's exact |z|==0 handling is
    # unknown; we output exactly 0 there (inv forced to 0).
    inv = jnp.where(mag2 > 0.0, jax.lax.rsqrt(mag2), 0.0)   # ~ 1/|z|   (EUP)
    act = jnp.maximum(mag2 * inv + b, 0.0)           # relu(|z| + bias)
    scale = act * inv                                # act / |z|
    or_ref[...] = scale * xr
    oi_ref[...] = scale * xi


def cmod_relu_planes(x_re, x_im, bias, *, tile_b=512, tile_n=512):
    """modReLU on separate (re, im) float32 planes.

    x_re, x_im: (B, N) float32
    bias:       (N,)   float32
    returns:    (out_re, out_im), each (B, N) float32
    """
    x_re = x_re.astype(jnp.float32)
    x_im = x_im.astype(jnp.float32)
    bias = bias.astype(jnp.float32)
    B, N = x_re.shape
    assert x_im.shape == (B, N) and bias.shape == (N,)

    # Lane-dense tiling: last dim a multiple of 128, second-last a multiple of 8.
    tn = _round_up(min(tile_n, _round_up(N, 128)), 128)
    n_pad = _round_up(N, tn)
    tb = _round_up(min(tile_b, _round_up(B, 8)), 8)
    b_pad = _round_up(B, tb)

    bias_p = bias if n_pad == N else jnp.pad(
        bias, (0, n_pad - N), constant_values=_BIAS_PAD)
    if (b_pad, n_pad) != (B, N):
        pad = ((0, b_pad - B), (0, n_pad - N))
        x_re = jnp.pad(x_re, pad)
        x_im = jnp.pad(x_im, pad)
    bias2d = bias_p.reshape(1, n_pad)

    grid = (b_pad // tb, n_pad // tn)
    x_spec = pl.BlockSpec((tb, tn), lambda i, j: (i, j))
    b_spec = pl.BlockSpec((1, tn), lambda i, j: (0, j))

    out_re, out_im = pl.pallas_call(
        _modrelu_kernel,
        out_shape=(jax.ShapeDtypeStruct((b_pad, n_pad), jnp.float32),
                   jax.ShapeDtypeStruct((b_pad, n_pad), jnp.float32)),
        grid_spec=pltpu.PrefetchScalarGridSpec(
            num_scalar_prefetch=0,
            grid=grid,
            in_specs=[x_spec, x_spec, b_spec],
            out_specs=[x_spec, x_spec],
        ),
        compiler_params=pltpu.CompilerParams(
            dimension_semantics=("parallel", "parallel")),
    )(x_re, x_im, bias2d)

    if (b_pad, n_pad) != (B, N):
        out_re = out_re[:B, :N]
        out_im = out_im[:B, :N]
    return out_re, out_im


class CmodReLU:
    """JAX mirror of the PyTorch CmodReLU module (forward only)."""

    def __init__(self, input_size):
        # Matches torch.nn.Parameter(torch.zeros(input_size)) — deterministic.
        self.bias = jnp.zeros((input_size,), dtype=jnp.float32)

    def __call__(self, incmplx):
        shape = incmplx.shape
        N = shape[-1]
        assert N == self.bias.shape[0]
        z2d = incmplx.reshape(-1, N)
        # TODO(synk): jax.lax.bitcast_convert_type does not support complex
        # dtypes, so the re/im split + recombine remain XLA ops outside the
        # kernel; the bandwidth-optimal path is cmod_relu_planes() directly on
        # pre-split planes.
        xr = jnp.real(z2d).astype(jnp.float32)
        xi = jnp.imag(z2d).astype(jnp.float32)
        out_re, out_im = cmod_relu_planes(xr, xi, self.bias)
        return jax.lax.complex(out_re, out_im).reshape(shape)


def _ref_modrelu(x_re, x_im, bias):
    mag = jnp.sqrt(x_re * x_re + x_im * x_im)
    act = jnp.maximum(mag + bias[None, :], 0.0)
    scale = jnp.where(act > 0.0, act / jnp.maximum(mag, 1e-30), 0.0)
    return scale * x_re, scale * x_im


if __name__ == "__main__":
    key = jax.random.PRNGKey(0)
    k_re, k_im, k_re2, k_im2 = jax.random.split(key, 4)

    # ---- Test 1: module-level path (complex64 in/out), small shape.
    B, N = 8, 32
    x_re = jax.random.normal(k_re, (B, N), dtype=jnp.float32)
    x_im = jax.random.normal(k_im, (B, N), dtype=jnp.float32)
    x = jax.lax.complex(x_re, x_im)

    mod = CmodReLU(N)
    mod.bias = jnp.linspace(-1.0, 1.0, N, dtype=jnp.float32)

    ref_re, ref_im = _ref_modrelu(x_re, x_im, mod.bias)   # reference first
    out = jax.block_until_ready(mod(x))
    assert out.shape == (B, N)
    assert jnp.allclose(jnp.real(out), ref_re, atol=1e-5, rtol=1e-5)
    assert jnp.allclose(jnp.imag(out), ref_im, atol=1e-5, rtol=1e-5)

    # ---- Test 2: planes path with an unaligned shape and a multi-step grid
    #      (exercises padding, bias gating of padded lanes, and 2-D tiling).
    B2, N2 = 20, 200
    x2_re = jax.random.normal(k_re2, (B2, N2), dtype=jnp.float32)
    x2_im = jax.random.normal(k_im2, (B2, N2), dtype=jnp.float32)
    bias2 = 0.3 * jax.random.normal(key, (N2,), dtype=jnp.float32)

    ref2_re, ref2_im = _ref_modrelu(x2_re, x2_im, bias2)   # reference first
    out2_re, out2_im = cmod_relu_planes(x2_re, x2_im, bias2,
                                        tile_b=8, tile_n=128)
    out2_re = jax.block_until_ready(out2_re)
    out2_im = jax.block_until_ready(out2_im)
    assert out2_re.shape == (B2, N2) and out2_im.shape == (B2, N2)
    assert jnp.allclose(out2_re, ref2_re, atol=1e-5, rtol=1e-5)
    assert jnp.allclose(out2_im, ref2_im, atol=1e-5, rtol=1e-5)

    print("KERNEL_OK")
</pallas_src>

<mosaic_0001>
module attributes {stable_mosaic.version = 11 : i64} {
  func.func @_modrelu_kernel(%arg0: i32, %arg1: i32, %arg2: memref<8x128xf32, #tpu.memory_space<vmem>>, %arg3: memref<8x128xf32, #tpu.memory_space<vmem>>, %arg4: memref<1x128xf32, #tpu.memory_space<vmem>>, %arg5: memref<8x128xf32, #tpu.memory_space<vmem>>, %arg6: memref<8x128xf32, #tpu.memory_space<vmem>>) attributes {dimension_semantics = [#tpu.dimension_semantics<parallel>, #tpu.dimension_semantics<parallel>], iteration_bounds = array<i64: 1, 1>, scalar_prefetch = 0 : i64, scratch_operands = 0 : i64, tpu.core_type = #tpu.core_type<tc>, window_params = [{transform_indices = @transform_0, window_bounds = array<i64: 8, 128>}, {transform_indices = @transform_1, window_bounds = array<i64: 8, 128>}, {transform_indices = @transform_2, window_bounds = array<i64: 1, 128>}, {transform_indices = @transform_3, window_bounds = array<i64: 8, 128>}, {transform_indices = @transform_4, window_bounds = array<i64: 8, 128>}]} {
    %c0 = arith.constant 0 : index
    %c0_0 = arith.constant 0 : index
    %0 = vector.load %arg2[%c0, %c0_0] : memref<8x128xf32, #tpu.memory_space<vmem>>, vector<8x128xf32>
    %c0_1 = arith.constant 0 : index
    %c0_2 = arith.constant 0 : index
    %1 = vector.load %arg3[%c0_1, %c0_2] : memref<8x128xf32, #tpu.memory_space<vmem>>, vector<8x128xf32>
    %c0_3 = arith.constant 0 : index
    %c0_4 = arith.constant 0 : index
    %2 = vector.load %arg4[%c0_3, %c0_4] : memref<1x128xf32, #tpu.memory_space<vmem>>, vector<1x128xf32>
    %3 = arith.mulf %0, %0 : vector<8x128xf32>
    %4 = arith.mulf %1, %1 : vector<8x128xf32>
    %5 = arith.addf %3, %4 : vector<8x128xf32>
    %cst = arith.constant 0.000000e+00 : f32
    %6 = vector.broadcast %cst : f32 to vector<8x128xf32>
    %7 = arith.cmpf ogt, %5, %6 : vector<8x128xf32>
    %8 = math.rsqrt %5 : vector<8x128xf32>
    %cst_5 = arith.constant 0.000000e+00 : f32
    %9 = vector.broadcast %cst_5 : f32 to vector<8x128xf32>
    %10 = arith.select %7, %8, %9 : vector<8x128xi1>, vector<8x128xf32>
    %11 = arith.mulf %5, %10 : vector<8x128xf32>
    %12 = vector.broadcast %2 : vector<1x128xf32> to vector<8x128xf32>
    %13 = arith.addf %11, %12 : vector<8x128xf32>
    %cst_6 = arith.constant 0.000000e+00 : f32
    %14 = vector.broadcast %cst_6 : f32 to vector<8x128xf32>
    %15 = arith.maximumf %13, %14 : vector<8x128xf32>
    %16 = arith.mulf %15, %10 : vector<8x128xf32>
    %17 = arith.mulf %16, %0 : vector<8x128xf32>
    %c0_7 = arith.constant 0 : index
    %c0_8 = arith.constant 0 : index
    %18 = vector.load %arg5[%c0_7, %c0_8] : memref<8x128xf32, #tpu.memory_space<vmem>>, vector<8x128xf32>
    tpu.vector_store %arg5[%c0_7, %c0_8], %17 {strides = array<i32>} : memref<8x128xf32, #tpu.memory_space<vmem>>, vector<8x128xf32>,
    %19 = arith.mulf %16, %1 : vector<8x128xf32>
    %c0_9 = arith.constant 0 : index
    %c0_10 = arith.constant 0 : index
    %20 = vector.load %arg6[%c0_9, %c0_10] : memref<8x128xf32, #tpu.memory_space<vmem>>, vector<8x128xf32>
    tpu.vector_store %arg6[%c0_9, %c0_10], %19 {strides = array<i32>} : memref<8x128xf32, #tpu.memory_space<vmem>>, vector<8x128xf32>,
    return
  }
  func.func @transform_0(%arg0: i32, %arg1: i32) -> (i32, i32) {
    %c0_i32 = arith.constant 0 : i32
    return %arg0, %arg1 : i32, i32
  }
  func.func @transform_1(%arg0: i32, %arg1: i32) -> (i32, i32) {
    %c0_i32 = arith.constant 0 : i32
    return %arg0, %arg1 : i32, i32
  }
  func.func @transform_2(%arg0: i32, %arg1: i32) -> (i32, i32) {
    %c0_i32 = arith.constant 0 : i32
    %c0_i32_0 = arith.constant 0 : i32
    return %c0_i32, %arg1 : i32, i32
  }
  func.func @transform_3(%arg0: i32, %arg1: i32) -> (i32, i32) {
    %c0_i32 = arith.constant 0 : i32
    return %arg0, %arg1 : i32, i32
  }
  func.func @transform_4(%arg0: i32, %arg1: i32) -> (i32, i32) {
    %c0_i32 = arith.constant 0 : i32
    return %arg0, %arg1 : i32, i32
  }
}

</mosaic_0001>

<llo_original>
// kernel: tpu_custom_call.1
$region0: #{tpu_custom_call.1}
  #allocation0 [shape = 'u32[]', space=smem, size = 0x4, offset = 0x4, fixed_abs, tag = 'smem constant byte address 0x4 - core index']
  #allocation1 [shape = 'u32[144,128]{1,0:T(1,128)}', space=vmem, size = 0x12000, scoped, tag = 'internal scratch']
  %s0 = inlined_call_operand.hbm [shape: f32[8,128], index: 0, kind: input, shape index: {}]
  %s1 = inlined_call_operand.hbm [shape: f32[8,128], index: 1, kind: input, shape index: {}]
  %s2 = inlined_call_operand.vmem [shape: f32[1,128], index: 2, kind: input, shape index: {}]
  %s3 = inlined_call_operand.hbm [shape: f32[8,128], index: 3, kind: output, shape index: {0}]
  %s4 = inlined_call_operand.hbm [shape: f32[8,128], index: 4, kind: output, shape index: {1}]
  %5 = xla_tuple %s3, %s4
  %s6 = sld [smem:[#allocation0]]
  $region38: #{tpu_custom_call.1} parent=0
    _
  %s8 = ssub.s32 1, %s6
  %s9 = scalar_select 0, %s8, %s6
  $region1: #{tpu_custom_call.1} parent=0
    #allocation2 [shape = 'u8[4096]{0}', space=vmem, size = 0x1000, scoped, tag = 'input window, operand 0, single buffered']
    #allocation3 [shape = 's32[1]{0}', space=sflag, size = 0x4, scoped, tag = 'scoped memory for tpu_custom_call.1']
    #allocation4 [shape = 's32[1]{0}', space=sflag, size = 0x4, scoped, tag = 'scoped memory for tpu_custom_call.1']
    #allocation5 [shape = 'u8[4096]{0}', space=vmem, size = 0x1000, scoped, tag = 'input window, operand 1, single buffered']
    #allocation6 [shape = 's32[1]{0}', space=sflag, size = 0x4, scoped, tag = 'scoped memory for tpu_custom_call.1']
    #allocation7 [shape = 'u8[4096]{0}', space=vmem, size = 0x1000, scoped, tag = 'output window, operand 0, single buffered']
    #allocation8 [shape = 'u8[4096]{0}', space=vmem, size = 0x1000, scoped, tag = 'output window, operand 1, single buffered']
    #allocation9 [shape = 's32[1]{0}', space=sflag, size = 0x4, scoped, tag = 'scoped memory for tpu_custom_call.1']
    %10 = vsyncpa [#allocation3], 0
    %11 = vsyncpa [#allocation6], 0
    %12 = vsyncpa [#allocation4], 0
    %13 = vsyncpa [#allocation9], 0
    // Predicated region
    $region2: #{tpu_custom_call.1} parent=1 // pred_check
      _
    $region3: #{tpu_custom_call.1} parent=1 // pred_check_branch
      %15 = sbr.rel (0) target = $region5
    $region4: #{tpu_custom_call.1} parent=1 // pred_region
      %s17 = ssub.s32 128, 128
      %18 = vsyncadd [#allocation3], %s17
      %s20 = sshll.u32 [#allocation2], 4
      %s21 = int_to_ptr.vmem [resolvable:$true] %s20
      %23 = dma.hbm_to_vmem [thread:$0]  %s0, 128, %s21, [#allocation3]
    $region5: #{tpu_custom_call.1} parent=1 // pred_fallthru
      _
    // Predicated region
    $region6: #{tpu_custom_call.1} parent=1 // pred_check
      _
    $region7: #{tpu_custom_call.1} parent=1 // pred_check_branch
      %25 = sbr.rel (0) target = $region9
    $region8: #{tpu_custom_call.1} parent=1 // pred_region
      %s27 = ssub.s32 128, 128
      %28 = vsyncadd [#allocation6], %s27
      %s30 = sshll.u32 [#allocation5], 4
      %s31 = int_to_ptr.vmem [resolvable:$true] %s30
      %33 = dma.hbm_to_vmem [thread:$0]  %s1, 128, %s31, [#allocation6]
    $region9: #{tpu_custom_call.1} parent=1 // pred_fallthru
      _
    // Predicated region
    $region10: #{tpu_custom_call.1} parent=1 // pred_check
      _
    $region11: #{tpu_custom_call.1} parent=1 // pred_check_branch
      %35 = sbr.rel (0) target = $region13
    $region12: #{tpu_custom_call.1} parent=1 // pred_region
      _
    $region13: #{tpu_custom_call.1} parent=1 // pred_fallthru
      _
    // Predicated region
    $region14: #{tpu_custom_call.1} parent=1 // pred_check
      _
    $region15: #{tpu_custom_call.1} parent=1 // pred_check_branch
      %37 = sbr.rel (0) target = $region17
    $region16: #{tpu_custom_call.1} parent=1 // pred_region
      %38 = dma.done [#allocation3], 128
    $region17: #{tpu_custom_call.1} parent=1 // pred_fallthru
      _
    // Predicated region
    $region18: #{tpu_custom_call.1} parent=1 // pred_check
      _
    $region19: #{tpu_custom_call.1} parent=1 // pred_check_branch
      %40 = sbr.rel (0) target = $region21
    $region20: #{tpu_custom_call.1} parent=1 // pred_region
      %41 = dma.done [#allocation6], 128
    $region21: #{tpu_custom_call.1} parent=1 // pred_fallthru
      _
    %v42 = vld [vmem:[#allocation2] sm:$0xff]
    %v43 = vld [vmem:[#allocation5] sm:$0xff]
    %v44 = vld [vmem:[%s2] sm:$0x1]
    %v45 = vmul.f32 %v42, %v42
    %v46 = vmul.f32 %v43, %v43
    %v47 = vadd.f32 %v45, %v46
    %vm48 = vcmp.gt.f32.partialorder %v47, 0.0
    %v49 = vrsqrt.pop %v47
    %v50 = vsel %vm48, %v49, 0.0
    %v51 = vmul.f32 %v47, %v50
    %v53 = vlaneseq
    %v54 = vshrl.u32 %v53, 7
    %v55 = vsub.s32 0, %v54
    %v56 = vrot.slane %v44, %v55
    %v58 = vadd.f32 %v51, %v56
    %v59 = vmax.f32 %v58, 0.0
    %v60 = vmul.f32 %v59, %v50
    %v61 = vmul.f32 %v60, %v42
    %62 = vst [vmem:[#allocation7] sm:$0xff] %v61
    %v63 = vmul.f32 %v60, %v43
    %64 = vst [vmem:[#allocation8] sm:$0xff] %v63
    // Predicated region
    $region22: #{tpu_custom_call.1} parent=1 // pred_check
      _
    $region23: #{tpu_custom_call.1} parent=1 // pred_check_branch
      %66 = sbr.rel (0) target = $region25
    $region24: #{tpu_custom_call.1} parent=1 // pred_region
      %s68 = ssub.s32 128, 128
      %69 = vsyncadd [#allocation4], %s68
      %s71 = sshll.u32 [#allocation7], 4
      %s72 = int_to_ptr.vmem [resolvable:$true] %s71
      %74 = dma.vmem_to_hbm [thread:$0]  %s72, 128, %s3, [#allocation4]
    $region25: #{tpu_custom_call.1} parent=1 // pred_fallthru
      _
    // Predicated region
    $region26: #{tpu_custom_call.1} parent=1 // pred_check
      _
    $region27: #{tpu_custom_call.1} parent=1 // pred_check_branch
      %76 = sbr.rel (0) target = $region29
    $region28: #{tpu_custom_call.1} parent=1 // pred_region
      %s78 = ssub.s32 128, 128
      %79 = vsyncadd [#allocation9], %s78
      %s81 = sshll.u32 [#allocation8], 4
      %s82 = int_to_ptr.vmem [resolvable:$true] %s81
      %84 = dma.vmem_to_hbm [thread:$0]  %s82, 128, %s4, [#allocation9]
    $region29: #{tpu_custom_call.1} parent=1 // pred_fallthru
      _
    // Predicated region
    $region30: #{tpu_custom_call.1} parent=1 // pred_check
      _
    $region31: #{tpu_custom_call.1} parent=1 // pred_check_branch
      %86 = sbr.rel (0) target = $region33
    $region32: #{tpu_custom_call.1} parent=1 // pred_region
      %87 = dma.done [#allocation4], 128
    $region33: #{tpu_custom_call.1} parent=1 // pred_fallthru
      _
    // Predicated region
    $region34: #{tpu_custom_call.1} parent=1 // pred_check
      _
    $region35: #{tpu_custom_call.1} parent=1 // pred_check_branch
      %89 = sbr.rel (0) target = $region37
    $region36: #{tpu_custom_call.1} parent=1 // pred_region
      %90 = dma.done [#allocation9], 128
    $region37: #{tpu_custom_call.1} parent=1 // pred_fallthru
      _
    %91 = vsyncpa [#allocation3], 1
    %92 = vsyncpa [#allocation6], 1
    %93 = vsyncpa [#allocation4], 1
    %94 = vsyncpa [#allocation9], 1

</llo_original>
